<compile_context>
chip_gen: v6e
topology: v6e:2x2x1
jax: 0.10.0
libtpu: 0.0.40
codegen_flags: <defaults>
</compile_context>

<pallas_src>
import functools

import jax
import jax.numpy as jnp
from jax.experimental import pallas as pl
from jax.experimental.pallas import tpu as pltpu

EPS = 1e-6


# ----------------------------------------------------------------------------
# Parameter-only glue (plain JAX): bilinear interp (align_corners=True) + the
# tiny depthwise convs that produce the gates.
# ----------------------------------------------------------------------------
def _interp_axis_align_corners(x, axis, out_size):
    in_size = x.shape[axis]
    if out_size == in_size:
        return x
    if out_size == 1:
        return jnp.take(x, jnp.zeros((1,), jnp.int32), axis=axis)
    pos = jnp.arange(out_size, dtype=jnp.float32) * ((in_size - 1) / (out_size - 1))
    i0 = jnp.clip(jnp.floor(pos).astype(jnp.int32), 0, in_size - 1)
    i1 = jnp.clip(i0 + 1, 0, in_size - 1)
    frac = pos - i0.astype(jnp.float32)
    a = jnp.take(x, i0, axis=axis)
    b = jnp.take(x, i1, axis=axis)
    bshape = [1] * x.ndim
    bshape[axis % x.ndim] = out_size
    frac = frac.reshape(bshape)
    return a * (1.0 - frac) + b * frac


def _bilinear_align_corners(x, out_h, out_w):
    return _interp_axis_align_corners(
        _interp_axis_align_corners(x, -2, out_h), -1, out_w)


def _dw_conv2d(x, w):  # x: (N, C, H, W), w: (C, 1, 3, 3)
    return jax.lax.conv_general_dilated(
        x, w, window_strides=(1, 1), padding=((1, 1), (1, 1)),
        dimension_numbers=('NCHW', 'OIHW', 'NCHW'),
        feature_group_count=x.shape[1],
        precision=jax.lax.Precision.HIGHEST)


def _dw_conv1d(x, w):  # x: (N, C, L), w: (C, 1, 3)
    y = jax.lax.conv_general_dilated(
        x[..., None], w[..., None], (1, 1), ((1, 1), (0, 0)),
        dimension_numbers=('NCHW', 'OIHW', 'NCHW'),
        feature_group_count=x.shape[1],
        precision=jax.lax.Precision.HIGHEST)
    return y[..., 0]


def _compute_gates(p, H, W, C):
    pd = C // 4
    # branch 1: (1, pd, 8, 8) -> (1, pd, H, W) -> depthwise 3x3
    g1 = _dw_conv2d(_bilinear_align_corners(p['hw'], H, W), p['conv_hw_w'])[0]  # (pd,H,W)
    # branch 2: (1, 1, pd, 8) -> (1, 1, pd, H) -> squeeze -> depthwise conv1d
    g2 = _dw_conv1d(_bilinear_align_corners(p['ch'], pd, H)[0], p['conv_ch_w'])[0]  # (pd,H)
    # branch 3: (1, 1, pd, 8) -> (1, 1, pd, W) -> squeeze -> depthwise conv1d
    g3 = _dw_conv1d(_bilinear_align_corners(p['cw'], pd, W)[0], p['conv_cw_w'])[0]  # (pd,W)
    return g1, g2, g3


def _build_kernel_operands(p, H, W, C):
    pd = C // 4
    HW = H * W
    g1, g2, g3 = _compute_gates(p, H, W, C)              # (pd,H,W), (pd,H), (pd,W)

    g1f = g1.reshape(pd, HW)                                              # gate[c,h,w]
    g2f = jnp.broadcast_to(g2[:, :, None], (pd, H, W)).reshape(pd, HW)    # gate[c,h]
    g3f = jnp.broadcast_to(g3[:, None, :], (pd, H, W)).reshape(pd, HW)    # gate[c,w]
    g4f = jnp.ones((pd, HW), jnp.float32)                                 # branch 4: identity gate
    G = jnp.concatenate([g1f, g2f, g3f, g4f], axis=0)                     # (C, HW)

    # Fold norm1's affine into the gates: (w1*xhat + b1)*G == xhat*(w1*G) + (b1*G)
    Ga = p['n1w'][:, None] * G
    Gb = p['n1b'][:, None] * G

    # Branch-4 1x1 conv, zero-padded over the 3*pd pass-through channels so a
    # single small (pd, C) @ (C, HW) matmul replaces the old (C, C) block-diag.
    W4 = p['conv4_w'][:, :, 0, 0]                                         # (pd_out, pd_in)
    W4pad = jnp.concatenate([jnp.zeros((pd, 3 * pd), jnp.float32), W4], axis=1)

    # Depthwise 3x3: per-tap lane shift + precombined (norm2_w * dw * edge mask)
    # tap planes; norm2's bias is pushed through the conv into bias_dw.
    dw = p['mlp_dw_w'][:, 0]                                              # (C, 3, 3)
    hh = jnp.arange(H)[:, None]
    ww = jnp.arange(W)[None, :]
    shifts, taps = [], []
    bias_dw = jnp.zeros((C, HW), jnp.float32)
    for dy in range(3):
        for dx in range(3):
            valid = ((hh + dy - 1 >= 0) & (hh + dy - 1 < H) &
                     (ww + dx - 1 >= 0) & (ww + dx - 1 < W))
            m = valid.astype(jnp.float32).reshape(HW)                     # (HW,)
            shifts.append((dy - 1) * W + (dx - 1))
            taps.append((p['n2w'] * dw[:, dy, dx])[:, None] * m[None, :])
            bias_dw = bias_dw + dw[:, dy, dx][:, None] * m[None, :]
    taps = jnp.stack(taps, axis=0)                                        # (9, C, HW)
    bias_dw = p['n2b'][:, None] * bias_dw                                 # (C, HW)

    PW = p['mlp_pw_w'][:, :, 0, 0]                                        # (C_out, C_in)
    return Ga, Gb, W4pad, taps, bias_dw, PW, tuple(shifts)


# ----------------------------------------------------------------------------
# Pallas kernel: one batch sample per grid step, (C, H*W) tile in VMEM.
# ----------------------------------------------------------------------------
def _mpqlb_kernel(shifts, pd, x_ref, ga_ref, gb_ref, w4_ref, taps_ref,
                  bdw_ref, pw_ref, o_ref):
    x = x_ref[0]                                   # (C, HW); channels = sublanes
    C, HW = x.shape

    # --- norm1: channel LayerNorm = sublane reduction (affine folded in Ga/Gb)
    mu = jnp.mean(x, axis=0, keepdims=True)
    xm = x - mu
    var = jnp.mean(xm * xm, axis=0, keepdims=True)
    xhat = xm * jax.lax.rsqrt(var + EPS)

    # --- branches 1-4: elementwise gates; only branch 4 mixes channels
    t = xhat * ga_ref[...] + gb_ref[...]
    x4 = jnp.dot(w4_ref[...], t, preferred_element_type=jnp.float32)      # (pd, HW)
    xc = jnp.concatenate([t[:3 * pd, :], x4], axis=0)                     # (C, HW)

    # --- norm2 (affine folded into taps / bias_dw)
    mu2 = jnp.mean(xc, axis=0, keepdims=True)
    xm2 = xc - mu2
    var2 = jnp.mean(xm2 * xm2, axis=0, keepdims=True)
    x2hat = xm2 * jax.lax.rsqrt(var2 + EPS)

    # --- depthwise 3x3 as lane rolls (XLU) * precombined masked tap planes
    acc = None
    for i, s in enumerate(shifts):
        rolled = x2hat if s == 0 else pltpu.roll(x2hat, shift=(-s) % HW, axis=1)
        term = rolled * taps_ref[i]
        acc = term if acc is None else acc + term
    acc = jnp.maximum(acc + bdw_ref[...], 0.0)                            # ReLU

    # --- mlp 1x1 conv on the MXU, then residual
    out = jnp.dot(pw_ref[...], acc, preferred_element_type=jnp.float32)
    o_ref[0] = out + x


def mpqlb_pallas(x_nchw, params):
    N, C, H, W = x_nchw.shape
    pd = C // 4
    HW = H * W
    Ga, Gb, W4pad, taps, bias_dw, PW, shifts = _build_kernel_operands(params, H, W, C)
    x2d = x_nchw.reshape(N, C, HW).astype(jnp.float32)    # free reshape, no transpose

    kernel = functools.partial(_mpqlb_kernel, shifts, pd)

    out = pl.pallas_call(
        kernel,
        out_shape=jax.ShapeDtypeStruct((N, C, HW), jnp.float32),
        grid=(N,),
        in_specs=[
            pl.BlockSpec((1, C, HW), lambda n: (n, 0, 0)),      # x (per sample)
            pl.BlockSpec((C, HW), lambda n: (0, 0)),            # Ga (norm1 w * gate)
            pl.BlockSpec((C, HW), lambda n: (0, 0)),            # Gb (norm1 b * gate)
            pl.BlockSpec((pd, C), lambda n: (0, 0)),            # padded conv_4 weight
            pl.BlockSpec((9, C, HW), lambda n: (0, 0, 0)),      # depthwise tap planes
            pl.BlockSpec((C, HW), lambda n: (0, 0)),            # norm2-bias through DW
            pl.BlockSpec((C, C), lambda n: (0, 0)),             # mlp 1x1 weight
        ],
        out_specs=pl.BlockSpec((1, C, HW), lambda n: (n, 0, 0)),
        compiler_params=pltpu.CompilerParams(
            dimension_semantics=("parallel",),          # 2 steps -> both v7x TCs fed
            vmem_limit_bytes=16 * 1024 * 1024,          # ~1 MiB actually used; fits all gens
        ),
    )(x2d, Ga, Gb, W4pad, taps, bias_dw, PW)

    return out.reshape(N, C, H, W)


# ----------------------------------------------------------------------------
# Pure-JAX reference mirroring the PyTorch forward (NCHW), for verification.
# ----------------------------------------------------------------------------
def _layernorm2d_ref(x, w, b):
    mu = x.mean(axis=1, keepdims=True)
    var = ((x - mu) ** 2).mean(axis=1, keepdims=True)
    y = (x - mu) / jnp.sqrt(var + EPS)
    return w[None, :, None, None] * y + b[None, :, None, None]


def mpqlb_ref(x, p):
    N, C, H, W = x.shape
    inp = x
    xn = _layernorm2d_ref(x, p['n1w'], p['n1b'])
    x1, x2, x3, x4 = jnp.split(xn, 4, axis=1)
    g1, g2, g3 = _compute_gates(p, H, W, C)
    x1 = x1 * g1[None]                              # (pd,H,W)
    x2 = x2 * g2[None, :, :, None]                  # gate[c,h]
    x3 = x3 * g3[None, :, None, :]                  # gate[c,w]
    x4 = jnp.einsum('nchw,oc->nohw', x4, p['conv4_w'][:, :, 0, 0],
                    precision=jax.lax.Precision.HIGHEST)
    xc = jnp.concatenate([x1, x2, x3, x4], axis=1)
    xc = _layernorm2d_ref(xc, p['n2w'], p['n2b'])
    h = _dw_conv2d(xc, p['mlp_dw_w'])
    h = jnp.maximum(h, 0.0)
    out = jnp.einsum('nchw,oc->nohw', h, p['mlp_pw_w'][:, :, 0, 0],
                     precision=jax.lax.Precision.HIGHEST)
    return out + inp


# ----------------------------------------------------------------------------
def _init_params(key, dim):
    pd = dim // 4
    ks = jax.random.split(key, 6)
    return {
        'hw': jnp.ones((1, pd, 8, 8), jnp.float32),
        'conv_hw_w': 0.1 * jax.random.normal(ks[0], (pd, 1, 3, 3), jnp.float32),
        'ch': jnp.ones((1, 1, pd, 8), jnp.float32),
        'conv_ch_w': 0.1 * jax.random.normal(ks[1], (pd, 1, 3), jnp.float32),
        'cw': jnp.ones((1, 1, pd, 8), jnp.float32),
        'conv_cw_w': 0.1 * jax.random.normal(ks[2], (pd, 1, 3), jnp.float32),
        'conv4_w': 0.1 * jax.random.normal(ks[3], (pd, pd, 1, 1), jnp.float32),
        'n1w': jnp.ones((dim,), jnp.float32),
        'n1b': jnp.zeros((dim,), jnp.float32),
        'n2w': jnp.ones((dim,), jnp.float32),
        'n2b': jnp.zeros((dim,), jnp.float32),
        'mlp_dw_w': 0.1 * jax.random.normal(ks[4], (dim, 1, 3, 3), jnp.float32),
        'mlp_pw_w': 0.1 * jax.random.normal(ks[5], (dim, dim, 1, 1), jnp.float32),
    }


if __name__ == "__main__":
    key = jax.random.PRNGKey(0)
    kp, kx = jax.random.split(key)
    N, C, H, W = 2, 32, 16, 16          # dim=32 -> partial_dim=8
    params = _init_params(kp, C)
    x = jax.random.normal(kx, (N, C, H, W), jnp.float32)

    out = jax.block_until_ready(jax.jit(mpqlb_pallas)(x, params))
    ref = jax.block_until_ready(mpqlb_ref(x, params))

    assert out.shape == (N, C, H, W), out.shape
    assert jnp.allclose(out, ref, rtol=2e-2, atol=2e-2), (
        float(jnp.max(jnp.abs(out - ref))))
    print("KERNEL_OK")
</pallas_src>

<mosaic_0001>
module attributes {stable_mosaic.version = 11 : i64} {
  func.func @_mpqlb_kernel(%arg0: i32, %arg1: memref<1x32x256xf32, #tpu.memory_space<vmem>>, %arg2: memref<32x256xf32, #tpu.memory_space<vmem>>, %arg3: memref<32x256xf32, #tpu.memory_space<vmem>>, %arg4: memref<8x32xf32, #tpu.memory_space<vmem>>, %arg5: memref<9x32x256xf32, #tpu.memory_space<vmem>>, %arg6: memref<32x256xf32, #tpu.memory_space<vmem>>, %arg7: memref<32x32xf32, #tpu.memory_space<vmem>>, %arg8: memref<1x32x256xf32, #tpu.memory_space<vmem>>) attributes {dimension_semantics = [#tpu.dimension_semantics<parallel>], iteration_bounds = array<i64: 2>, scalar_prefetch = 0 : i64, scratch_operands = 0 : i64, tpu.core_type = #tpu.core_type<tc>, window_params = [{transform_indices = @transform_0, window_bounds = array<i64: 1, 32, 256>}, {pipeline_mode = #tpu.pipeline_mode<synchronous>, transform_indices = @transform_1, window_bounds = array<i64: 32, 256>}, {pipeline_mode = #tpu.pipeline_mode<synchronous>, transform_indices = @transform_2, window_bounds = array<i64: 32, 256>}, {pipeline_mode = #tpu.pipeline_mode<synchronous>, transform_indices = @transform_3, window_bounds = array<i64: 8, 32>}, {pipeline_mode = #tpu.pipeline_mode<synchronous>, transform_indices = @transform_4, window_bounds = array<i64: 9, 32, 256>}, {pipeline_mode = #tpu.pipeline_mode<synchronous>, transform_indices = @transform_5, window_bounds = array<i64: 32, 256>}, {pipeline_mode = #tpu.pipeline_mode<synchronous>, transform_indices = @transform_6, window_bounds = array<i64: 32, 32>}, {transform_indices = @transform_7, window_bounds = array<i64: 1, 32, 256>}]} {
    %c0 = arith.constant 0 : index
    %c0_0 = arith.constant 0 : index
    %c0_1 = arith.constant 0 : index
    %0 = vector.load %arg1[%c0, %c0_0, %c0_1] : memref<1x32x256xf32, #tpu.memory_space<vmem>>, vector<1x32x256xf32>
    %1 = vector.shape_cast %0 : vector<1x32x256xf32> to vector<32x256xf32>
    %cst = arith.constant dense<0.000000e+00> : vector<256xf32>
    %2 = vector.multi_reduction <add>, %1, %cst [0] : vector<32x256xf32> to vector<256xf32>
    %3 = vector.shape_cast %2 : vector<256xf32> to vector<1x256xf32>
    %cst_2 = arith.constant 3.200000e+01 : f32
    %4 = vector.broadcast %cst_2 : f32 to vector<1x256xf32>
    %5 = arith.divf %3, %4 : vector<1x256xf32>
    %6 = vector.broadcast %5 : vector<1x256xf32> to vector<32x256xf32>
    %7 = arith.subf %1, %6 : vector<32x256xf32>
    %8 = arith.mulf %7, %7 : vector<32x256xf32>
    %cst_3 = arith.constant dense<0.000000e+00> : vector<256xf32>
    %9 = vector.multi_reduction <add>, %8, %cst_3 [0] : vector<32x256xf32> to vector<256xf32>
    %10 = vector.shape_cast %9 : vector<256xf32> to vector<1x256xf32>
    %cst_4 = arith.constant 3.200000e+01 : f32
    %11 = vector.broadcast %cst_4 : f32 to vector<1x256xf32>
    %12 = arith.divf %10, %11 : vector<1x256xf32>
    %cst_5 = arith.constant 9.99999997E-7 : f32
    %13 = vector.broadcast %cst_5 : f32 to vector<1x256xf32>
    %14 = arith.addf %12, %13 : vector<1x256xf32>
    %15 = math.rsqrt %14 : vector<1x256xf32>
    %16 = vector.broadcast %15 : vector<1x256xf32> to vector<32x256xf32>
    %17 = arith.mulf %7, %16 : vector<32x256xf32>
    %c0_6 = arith.constant 0 : index
    %c0_7 = arith.constant 0 : index
    %18 = vector.load %arg2[%c0_6, %c0_7] : memref<32x256xf32, #tpu.memory_space<vmem>>, vector<32x256xf32>
    %19 = arith.mulf %17, %18 : vector<32x256xf32>
    %c0_8 = arith.constant 0 : index
    %c0_9 = arith.constant 0 : index
    %20 = vector.load %arg3[%c0_8, %c0_9] : memref<32x256xf32, #tpu.memory_space<vmem>>, vector<32x256xf32>
    %21 = arith.addf %19, %20 : vector<32x256xf32>
    %c0_10 = arith.constant 0 : index
    %c0_11 = arith.constant 0 : index
    %22 = vector.load %arg4[%c0_10, %c0_11] : memref<8x32xf32, #tpu.memory_space<vmem>>, vector<8x32xf32>
    %cst_12 = arith.constant dense<0.000000e+00> : vector<8x256xf32>
    %23 = tpu.matmul %22, %21, %cst_12 {dimension_numbers = #tpu.dot_dimension_numbers<[1], [0], [0], [1], [0, 0, 1, 1], [], []>} : vector<8x32xf32>, vector<32x256xf32>, vector<8x256xf32> -> vector<8x256xf32>
    %24 = vector.extract_strided_slice %21 {offsets = [0, 0], sizes = [24, 256], strides = [1, 1]} : vector<32x256xf32> to vector<24x256xf32>
    %25 = tpu.concatenate %24, %23 in 0 : vector<24x256xf32>, vector<8x256xf32> -> vector<32x256xf32>
    %cst_13 = arith.constant dense<0.000000e+00> : vector<256xf32>
    %26 = vector.multi_reduction <add>, %25, %cst_13 [0] : vector<32x256xf32> to vector<256xf32>
    %27 = vector.shape_cast %26 : vector<256xf32> to vector<1x256xf32>
    %cst_14 = arith.constant 3.200000e+01 : f32
    %28 = vector.broadcast %cst_14 : f32 to vector<1x256xf32>
    %29 = arith.divf %27, %28 : vector<1x256xf32>
    %30 = vector.broadcast %29 : vector<1x256xf32> to vector<32x256xf32>
    %31 = arith.subf %25, %30 : vector<32x256xf32>
    %32 = arith.mulf %31, %31 : vector<32x256xf32>
    %cst_15 = arith.constant dense<0.000000e+00> : vector<256xf32>
    %33 = vector.multi_reduction <add>, %32, %cst_15 [0] : vector<32x256xf32> to vector<256xf32>
    %34 = vector.shape_cast %33 : vector<256xf32> to vector<1x256xf32>
    %cst_16 = arith.constant 3.200000e+01 : f32
    %35 = vector.broadcast %cst_16 : f32 to vector<1x256xf32>
    %36 = arith.divf %34, %35 : vector<1x256xf32>
    %cst_17 = arith.constant 9.99999997E-7 : f32
    %37 = vector.broadcast %cst_17 : f32 to vector<1x256xf32>
    %38 = arith.addf %36, %37 : vector<1x256xf32>
    %39 = math.rsqrt %38 : vector<1x256xf32>
    %40 = vector.broadcast %39 : vector<1x256xf32> to vector<32x256xf32>
    %41 = arith.mulf %31, %40 : vector<32x256xf32>
    %c17_i32 = arith.constant 17 : i32
    %42 = tpu.dynamic_rotate %41 by %c17_i32 dim 1 : vector<32x256xf32>, i32 -> vector<32x256xf32>
    %c0_18 = arith.constant 0 : index
    %c0_19 = arith.constant 0 : index
    %c0_20 = arith.constant 0 : index
    %43 = vector.load %arg5[%c0_18, %c0_19, %c0_20] : memref<9x32x256xf32, #tpu.memory_space<vmem>>, vector<1x32x256xf32>
    %44 = vector.shape_cast %43 : vector<1x32x256xf32> to vector<32x256xf32>
    %45 = arith.mulf %42, %44 : vector<32x256xf32>
    %c16_i32 = arith.constant 16 : i32
    %46 = tpu.dynamic_rotate %41 by %c16_i32 dim 1 : vector<32x256xf32>, i32 -> vector<32x256xf32>
    %c1 = arith.constant 1 : index
    %c0_21 = arith.constant 0 : index
    %c0_22 = arith.constant 0 : index
    %47 = vector.load %arg5[%c1, %c0_21, %c0_22] : memref<9x32x256xf32, #tpu.memory_space<vmem>>, vector<1x32x256xf32>
    %48 = vector.shape_cast %47 : vector<1x32x256xf32> to vector<32x256xf32>
    %49 = arith.mulf %46, %48 : vector<32x256xf32>
    %50 = arith.addf %45, %49 : vector<32x256xf32>
    %c15_i32 = arith.constant 15 : i32
    %51 = tpu.dynamic_rotate %41 by %c15_i32 dim 1 : vector<32x256xf32>, i32 -> vector<32x256xf32>
    %c2 = arith.constant 2 : index
    %c0_23 = arith.constant 0 : index
    %c0_24 = arith.constant 0 : index
    %52 = vector.load %arg5[%c2, %c0_23, %c0_24] : memref<9x32x256xf32, #tpu.memory_space<vmem>>, vector<1x32x256xf32>
    %53 = vector.shape_cast %52 : vector<1x32x256xf32> to vector<32x256xf32>
    %54 = arith.mulf %51, %53 : vector<32x256xf32>
    %55 = arith.addf %50, %54 : vector<32x256xf32>
    %c1_i32 = arith.constant 1 : i32
    %56 = tpu.dynamic_rotate %41 by %c1_i32 dim 1 : vector<32x256xf32>, i32 -> vector<32x256xf32>
    %c3 = arith.constant 3 : index
    %c0_25 = arith.constant 0 : index
    %c0_26 = arith.constant 0 : index
    %57 = vector.load %arg5[%c3, %c0_25, %c0_26] : memref<9x32x256xf32, #tpu.memory_space<vmem>>, vector<1x32x256xf32>
    %58 = vector.shape_cast %57 : vector<1x32x256xf32> to vector<32x256xf32>
    %59 = arith.mulf %56, %58 : vector<32x256xf32>
    %60 = arith.addf %55, %59 : vector<32x256xf32>
    %c4 = arith.constant 4 : index
    %c0_27 = arith.constant 0 : index
    %c0_28 = arith.constant 0 : index
    %61 = vector.load %arg5[%c4, %c0_27, %c0_28] : memref<9x32x256xf32, #tpu.memory_space<vmem>>, vector<1x32x256xf32>
    %62 = vector.shape_cast %61 : vector<1x32x256xf32> to vector<32x256xf32>
    %63 = arith.mulf %41, %62 : vector<32x256xf32>
    %64 = arith.addf %60, %63 : vector<32x256xf32>
    %c255_i32 = arith.constant 255 : i32
    %65 = tpu.dynamic_rotate %41 by %c255_i32 dim 1 : vector<32x256xf32>, i32 -> vector<32x256xf32>
    %c5 = arith.constant 5 : index
    %c0_29 = arith.constant 0 : index
    %c0_30 = arith.constant 0 : index
    %66 = vector.load %arg5[%c5, %c0_29, %c0_30] : memref<9x32x256xf32, #tpu.memory_space<vmem>>, vector<1x32x256xf32>
    %67 = vector.shape_cast %66 : vector<1x32x256xf32> to vector<32x256xf32>
    %68 = arith.mulf %65, %67 : vector<32x256xf32>
    %69 = arith.addf %64, %68 : vector<32x256xf32>
    %c241_i32 = arith.constant 241 : i32
    %70 = tpu.dynamic_rotate %41 by %c241_i32 dim 1 : vector<32x256xf32>, i32 -> vector<32x256xf32>
    %c6 = arith.constant 6 : index
    %c0_31 = arith.constant 0 : index
    %c0_32 = arith.constant 0 : index
    %71 = vector.load %arg5[%c6, %c0_31, %c0_32] : memref<9x32x256xf32, #tpu.memory_space<vmem>>, vector<1x32x256xf32>
    %72 = vector.shape_cast %71 : vector<1x32x256xf32> to vector<32x256xf32>
    %73 = arith.mulf %70, %72 : vector<32x256xf32>
    %74 = arith.addf %69, %73 : vector<32x256xf32>
    %c240_i32 = arith.constant 240 : i32
    %75 = tpu.dynamic_rotate %41 by %c240_i32 dim 1 : vector<32x256xf32>, i32 -> vector<32x256xf32>
    %c7 = arith.constant 7 : index
    %c0_33 = arith.constant 0 : index
    %c0_34 = arith.constant 0 : index
    %76 = vector.load %arg5[%c7, %c0_33, %c0_34] : memref<9x32x256xf32, #tpu.memory_space<vmem>>, vector<1x32x256xf32>
    %77 = vector.shape_cast %76 : vector<1x32x256xf32> to vector<32x256xf32>
    %78 = arith.mulf %75, %77 : vector<32x256xf32>
    %79 = arith.addf %74, %78 : vector<32x256xf32>
    %c239_i32 = arith.constant 239 : i32
    %80 = tpu.dynamic_rotate %41 by %c239_i32 dim 1 : vector<32x256xf32>, i32 -> vector<32x256xf32>
    %c8 = arith.constant 8 : index
    %c0_35 = arith.constant 0 : index
    %c0_36 = arith.constant 0 : index
    %81 = vector.load %arg5[%c8, %c0_35, %c0_36] : memref<9x32x256xf32, #tpu.memory_space<vmem>>, vector<1x32x256xf32>
    %82 = vector.shape_cast %81 : vector<1x32x256xf32> to vector<32x256xf32>
    %83 = arith.mulf %80, %82 : vector<32x256xf32>
    %84 = arith.addf %79, %83 : vector<32x256xf32>
    %c0_37 = arith.constant 0 : index
    %c0_38 = arith.constant 0 : index
    %85 = vector.load %arg6[%c0_37, %c0_38] : memref<32x256xf32, #tpu.memory_space<vmem>>, vector<32x256xf32>
    %86 = arith.addf %84, %85 : vector<32x256xf32>
    %cst_39 = arith.constant 0.000000e+00 : f32
    %87 = vector.broadcast %cst_39 : f32 to vector<32x256xf32>
    %88 = arith.maximumf %86, %87 : vector<32x256xf32>
    %c0_40 = arith.constant 0 : index
    %c0_41 = arith.constant 0 : index
    %89 = vector.load %arg7[%c0_40, %c0_41] : memref<32x32xf32, #tpu.memory_space<vmem>>, vector<32x32xf32>
    %cst_42 = arith.constant dense<0.000000e+00> : vector<32x256xf32>
    %90 = tpu.matmul %89, %88, %cst_42 {dimension_numbers = #tpu.dot_dimension_numbers<[1], [0], [0], [1], [0, 0, 1, 1], [], []>} : vector<32x32xf32>, vector<32x256xf32>, vector<32x256xf32> -> vector<32x256xf32>
    %91 = arith.addf %90, %1 : vector<32x256xf32>
    %c0_43 = arith.constant 0 : index
    %c0_44 = arith.constant 0 : index
    %c0_45 = arith.constant 0 : index
    %92 = vector.load %arg8[%c0_43, %c0_44, %c0_45] : memref<1x32x256xf32, #tpu.memory_space<vmem>>, vector<1x32x256xf32>
    %93 = vector.shape_cast %92 : vector<1x32x256xf32> to vector<32x256xf32>
    %94 = vector.shape_cast %91 : vector<32x256xf32> to vector<1x32x256xf32>
    tpu.vector_store %arg8[%c0_43, %c0_44, %c0_45], %94 {strides = array<i32>} : memref<1x32x256xf32, #tpu.memory_space<vmem>>, vector<1x32x256xf32>,
    return
  }
  func.func @transform_0(%arg0: i32) -> (i32, i32, i32) {
    %c0_i32 = arith.constant 0 : i32
    %c0_i32_0 = arith.constant 0 : i32
    %c0_i32_1 = arith.constant 0 : i32
    return %arg0, %c0_i32, %c0_i32_0 : i32, i32, i32
  }
  func.func @transform_1(%arg0: i32) -> (i32, i32) {
    %c0_i32 = arith.constant 0 : i32
    %c0_i32_0 = arith.constant 0 : i32
    %c0_i32_1 = arith.constant 0 : i32
    return %c0_i32, %c0_i32_0 : i32, i32
  }
  func.func @transform_2(%arg0: i32) -> (i32, i32) {
    %c0_i32 = arith.constant 0 : i32
    %c0_i32_0 = arith.constant 0 : i32
    %c0_i32_1 = arith.constant 0 : i32
    return %c0_i32, %c0_i32_0 : i32, i32
  }
  func.func @transform_3(%arg0: i32) -> (i32, i32) {
    %c0_i32 = arith.constant 0 : i32
    %c0_i32_0 = arith.constant 0 : i32
    %c0_i32_1 = arith.constant 0 : i32
    return %c0_i32, %c0_i32_0 : i32, i32
  }
  func.func @transform_4(%arg0: i32) -> (i32, i32, i32) {
    %c0_i32 = arith.constant 0 : i32
    %c0_i32_0 = arith.constant 0 : i32
    %c0_i32_1 = arith.constant 0 : i32
    %c0_i32_2 = arith.constant 0 : i32
    return %c0_i32, %c0_i32_0, %c0_i32_1 : i32, i32, i32
  }
  func.func @transform_5(%arg0: i32) -> (i32, i32) {
    %c0_i32 = arith.constant 0 : i32
    %c0_i32_0 = arith.constant 0 : i32
    %c0_i32_1 = arith.constant 0 : i32
    return %c0_i32, %c0_i32_0 : i32, i32
  }
  func.func @transform_6(%arg0: i32) -> (i32, i32) {
    %c0_i32 = arith.constant 0 : i32
    %c0_i32_0 = arith.constant 0 : i32
    %c0_i32_1 = arith.constant 0 : i32
    return %c0_i32, %c0_i32_0 : i32, i32
  }
  func.func @transform_7(%arg0: i32) -> (i32, i32, i32) {
    %c0_i32 = arith.constant 0 : i32
    %c0_i32_0 = arith.constant 0 : i32
    %c0_i32_1 = arith.constant 0 : i32
    return %arg0, %c0_i32, %c0_i32_0 : i32, i32, i32
  }
}

</mosaic_0001>

<llo_original>
// kernel: mpqlb_pallas.1
$region0: #{mpqlb_pallas.1}
  #allocation0 [shape = 'u32[]', space=smem, size = 0x4, offset = 0x4, fixed_abs, tag = 'smem constant byte address 0x4 - core index']
  #allocation1 [shape = 'u32[144,128]{1,0:T(1,128)}', space=vmem, size = 0x12000, scoped, tag = 'internal scratch']
  %s0 = inlined_call_operand.vmem [shape: f32[2,32,256], index: 0, kind: input, shape index: {}]
  %s1 = inlined_call_operand.vmem [shape: f32[32,256], index: 1, kind: input, shape index: {}]
  %s2 = inlined_call_operand.vmem [shape: f32[32,256], index: 2, kind: input, shape index: {}]
  %s3 = inlined_call_operand.vmem [shape: f32[8,32], index: 3, kind: input, shape index: {}]
  %s4 = inlined_call_operand.vmem [shape: f32[9,32,256], index: 4, kind: input, shape index: {}]
  %s5 = inlined_call_operand.vmem [shape: f32[32,256], index: 5, kind: input, shape index: {}]
  %s6 = inlined_call_operand.vmem [shape: f32[32,32], index: 6, kind: input, shape index: {}]
  %s7 = inlined_call_operand.vmem [shape: f32[2,32,256], index: 7, kind: output, shape index: {}]
  %s8 = sld [smem:[#allocation0]]
  $region61: #{mpqlb_pallas.1} parent=0
    _
  %s10 = ssub.s32 1, %s8
  %s11 = scalar_select 0, %s10, %s8
  loop: start=0, step=1, limit=4
  $region2: #{mpqlb_pallas.1} parent=0 // loop_pre_header
    _
  $region3: #{mpqlb_pallas.1} parent=0 // loop_header
    %s13 = sphi 0, %s17
    %p14 = scmp.ge.s32.totalorder %s13, 4
    %s23 = sphi 0, %s25
    %s26 = sphi 0, %s23
    %s27 = sphi 0, %s26
    %s43 = sphi 0, %s27
    %s47 = sphi 0, %s47
    %s49 = sphi 0, %s47
    %s50 = sphi 0, %s49
    %s64 = sphi 0, %s50
    %s68 = sphi 0, %s68
    %s70 = sphi 0, %s68
    %s71 = sphi 0, %s70
    %s85 = sphi 0, %s71
    %s89 = sphi 0, %s89
    %s91 = sphi 0, %s89
    %s92 = sphi 0, %s91
    %s106 = sphi 0, %s92
    %s110 = sphi 0, %s110
    %s112 = sphi 0, %s110
    %s113 = sphi 0, %s112
    %s127 = sphi 0, %s113
    %s131 = sphi 0, %s131
    %s133 = sphi 0, %s131
    %s134 = sphi 0, %s133
    %s148 = sphi 0, %s134
    %s152 = sphi 0, %s152
    %s154 = sphi 0, %s152
    %s155 = sphi 0, %s154
    %s169 = sphi 0, %s155
    %s175 = sphi 0, %s177
    %s178 = sphi 0, %s175
    %s179 = sphi 0, %s178
    %s195 = sphi 0, %s179
  $region4: #{mpqlb_pallas.1} parent=0 // loop_header_branch
    %16 = sbr.rel (%p14) target = $region8
  $region5: #{mpqlb_pallas.1} parent=0 // loop_body
    %s18 = ssub.s32 %s13, 1
    %s19 = ssub.s32 %s13, 2
    %s20 = sadd.s32 %s13, 1
    %s21 = ssub.s32 %s13, %s20
    %p22 = scmp.eq.s32.totalorder %s21, 0
    %s24 = sadd.s32 %s23, 1
    %s25 = scalar_select %p22, %s23, %s24
    %p28 = pneg %p22
    %p29 = scmp.eq.s32.totalorder %s13, 1
    %p30 = por %p28, %p29
    %p31 = scmp.ne.s32.totalorder %s23, %s26
    %p32 = scmp.eq.s32.totalorder %s13, 0
    %p33 = por %p31, %p32
    %p34 = scmp.ne.s32.totalorder %s23, %s26
    %p35 = scmp.eq.s32.totalorder %s18, 1
    %p36 = por %p34, %p35
    %p37 = scmp.ne.s32.totalorder %s26, %s27
    %p38 = scmp.eq.s32.totalorder %s18, 0
    %p39 = por %p37, %p38
    %p40 = scmp.ne.s32.totalorder %s26, %s27
    %p41 = scmp.eq.s32.totalorder %s19, 1
    %p42 = por %p40, %p41
    %p44 = scmp.ne.s32.totalorder %s27, %s43
    %p45 = scmp.eq.s32.totalorder %s19, 0
    %p46 = por %p44, %p45
    %s48 = sadd.s32 %s47, 1
    %p51 = scmp.eq.s32.totalorder %s13, 1
    %p52 = scmp.ne.s32.totalorder %s47, %s49
    %p53 = scmp.eq.s32.totalorder %s13, 0
    %p54 = por %p52, %p53
    %p55 = scmp.ne.s32.totalorder %s47, %s49
    %p56 = scmp.eq.s32.totalorder %s18, 1
    %p57 = por %p55, %p56
    %p58 = scmp.ne.s32.totalorder %s49, %s50
    %p59 = scmp.eq.s32.totalorder %s18, 0
    %p60 = por %p58, %p59
    %p61 = scmp.ne.s32.totalorder %s49, %s50
    %p62 = scmp.eq.s32.totalorder %s19, 1
    %p63 = por %p61, %p62
    %p65 = scmp.ne.s32.totalorder %s50, %s64
    %p66 = scmp.eq.s32.totalorder %s19, 0
    %p67 = por %p65, %p66
    %s69 = sadd.s32 %s68, 1
    %p72 = scmp.eq.s32.totalorder %s13, 1
    %p73 = scmp.ne.s32.totalorder %s68, %s70
    %p74 = scmp.eq.s32.totalorder %s13, 0
    %p75 = por %p73, %p74
    %p76 = scmp.ne.s32.totalorder %s68, %s70
    %p77 = scmp.eq.s32.totalorder %s18, 1
    %p78 = por %p76, %p77
    %p79 = scmp.ne.s32.totalorder %s70, %s71
    %p80 = scmp.eq.s32.totalorder %s18, 0
    %p81 = por %p79, %p80
    %p82 = scmp.ne.s32.totalorder %s70, %s71
    %p83 = scmp.eq.s32.totalorder %s19, 1
    %p84 = por %p82, %p83
    %p86 = scmp.ne.s32.totalorder %s71, %s85
    %p87 = scmp.eq.s32.totalorder %s19, 0
    %p88 = por %p86, %p87
    %s90 = sadd.s32 %s89, 1
    %p93 = scmp.eq.s32.totalorder %s13, 1
    %p94 = scmp.ne.s32.totalorder %s89, %s91
    %p95 = scmp.eq.s32.totalorder %s13, 0
    %p96 = por %p94, %p95
    %p97 = scmp.ne.s32.totalorder %s89, %s91
    %p98 = scmp.eq.s32.totalorder %s18, 1
    %p99 = por %p97, %p98
    %p100 = scmp.ne.s32.totalorder %s91, %s92
    %p101 = scmp.eq.s32.totalorder %s18, 0
    %p102 = por %p100, %p101
    %p103 = scmp.ne.s32.totalorder %s91, %s92
    %p104 = scmp.eq.s32.totalorder %s19, 1
    %p105 = por %p103, %p104
    %p107 = scmp.ne.s32.totalorder %s92, %s106
    %p108 = scmp.eq.s32.totalorder %s19, 0
    %p109 = por %p107, %p108
    %s111 = sadd.s32 %s110, 1
    %p114 = scmp.eq.s32.totalorder %s13, 1
    %p115 = scmp.ne.s32.totalorder %s110, %s112
    %p116 = scmp.eq.s32.totalorder %s13, 0
    %p117 = por %p115, %p116
    %p118 = scmp.ne.s32.totalorder %s110, %s112
    %p119 = scmp.eq.s32.totalorder %s18, 1
    %p120 = por %p118, %p119
    %p121 = scmp.ne.s32.totalorder %s112, %s113
    %p122 = scmp.eq.s32.totalorder %s18, 0
    %p123 = por %p121, %p122
    %p124 = scmp.ne.s32.totalorder %s112, %s113
    %p125 = scmp.eq.s32.totalorder %s19, 1
    %p126 = por %p124, %p125
    %p128 = scmp.ne.s32.totalorder %s113, %s127
    %p129 = scmp.eq.s32.totalorder %s19, 0
    %p130 = por %p128, %p129
    %s132 = sadd.s32 %s131, 1
    %p135 = scmp.eq.s32.totalorder %s13, 1
    %p136 = scmp.ne.s32.totalorder %s131, %s133
    %p137 = scmp.eq.s32.totalorder %s13, 0
    %p138 = por %p136, %p137
    %p139 = scmp.ne.s32.totalorder %s131, %s133
    %p140 = scmp.eq.s32.totalorder %s18, 1
    %p141 = por %p139, %p140
    %p142 = scmp.ne.s32.totalorder %s133, %s134
    %p143 = scmp.eq.s32.totalorder %s18, 0
    %p144 = por %p142, %p143
    %p145 = scmp.ne.s32.totalorder %s133, %s134
    %p146 = scmp.eq.s32.totalorder %s19, 1
    %p147 = por %p145, %p146
    %p149 = scmp.ne.s32.totalorder %s134, %s148
    %p150 = scmp.eq.s32.totalorder %s19, 0
    %p151 = por %p149, %p150
    %s153 = sadd.s32 %s152, 1
    %p156 = scmp.eq.s32.totalorder %s13, 1
    %p157 = scmp.ne.s32.totalorder %s152, %s154
    %p158 = scmp.eq.s32.totalorder %s13, 0
    %p159 = por %p157, %p158
    %p160 = scmp.ne.s32.totalorder %s152, %s154
    %p161 = scmp.eq.s32.totalorder %s18, 1
    %p162 = por %p160, %p161
    %p163 = scmp.ne.s32.totalorder %s154, %s155
    %p164 = scmp.eq.s32.totalorder %s18, 0
    %p165 = por %p163, %p164
    %p166 = scmp.ne.s32.totalorder %s154, %s155
    %p167 = scmp.eq.s32.totalorder %s19, 1
    %p168 = por %p166, %p167
    %p170 = scmp.ne.s32.totalorder %s155, %s169
    %p171 = scmp.eq.s32.totalorder %s19, 0
    %p172 = por %p170, %p171
    %s173 = ssub.s32 %s13, %s20
    %p174 = scmp.eq.s32.totalorder %s173, 0
    %s176 = sadd.s32 %s175, 1
    %s177 = scalar_select %p174, %s175, %s176
    %p180 = pneg %p174
    %p181 = scmp.eq.s32.totalorder %s13, 1
    %p182 = por %p180, %p181
    %p183 = scmp.ne.s32.totalorder %s175, %s178
    %p184 = scmp.eq.s32.totalorder %s13, 0
    %p185 = por %p183, %p184
    %p186 = scmp.ne.s32.totalorder %s175, %s178
    %p187 = scmp.eq.s32.totalorder %s18, 1
    %p188 = por %p186, %p187
    %p189 = scmp.ne.s32.totalorder %s178, %s179
    %p190 = scmp.eq.s32.totalorder %s18, 0
    %p191 = por %p189, %p190
    %p192 = scmp.ne.s32.totalorder %s178, %s179
    %p193 = scmp.eq.s32.totalorder %s19, 1
    %p194 = por %p192, %p193
    %p196 = scmp.ne.s32.totalorder %s179, %s195
    %p197 = scmp.eq.s32.totalorder %s19, 0
    %p198 = por %p196, %p197
    %p199 = scmp.le.s32.totalorder 1, %s13
    %p200 = scmp.lt.s32.totalorder %s13, 3
    %p201 = pnand %p199, %p200
    %p202 = pneg %p201
    // Predicated region
    $region9: #{mpqlb_pallas.1} parent=5 // pred_check
      _
    $region10: #{mpqlb_pallas.1} parent=5 // pred_check_branch
      %204 = sbr.rel (%p201) target = $region12
    $region11: #{mpqlb_pallas.1} parent=5 // pred_region
      %s205 = ssub.s32 %s13, 1
      // Predicated region
      $region13: #{mpqlb_pallas.1} parent=11 // pred_check
        %p206 = pneg %p60
      $region14: #{mpqlb_pallas.1} parent=11 // pred_check_branch
        %208 = sbr.rel (%p206) target = $region16
      $region15: #{mpqlb_pallas.1} parent=11 // pred_region
        _
      $region16: #{mpqlb_pallas.1} parent=11 // pred_fallthru
        _
      // Predicated region
      $region17: #{mpqlb_pallas.1} parent=11 // pred_check
        %p209 = pneg %p81
      $region18: #{mpqlb_pallas.1} parent=11 // pred_check_branch
        %211 = sbr.rel (%p209) target = $region20
      $region19: #{mpqlb_pallas.1} parent=11 // pred_region
        _
      $region20: #{mpqlb_pallas.1} parent=11 // pred_fallthru
        _
      // Predicated region
      $region21: #{mpqlb_pallas.1} parent=11 // pred_check
        %p212 = pneg %p102
      $region22: #{mpqlb_pallas.1} parent=11 // pred_check_branch
        %214 = sbr.rel (%p212) target = $region24
      $region23: #{mpqlb_pallas.1} parent=11 // pred_region
        _
      $region24: #{mpqlb_pallas.1} parent=11 // pred_fallthru
        _
      // Predicated region
      $region25: #{mpqlb_pallas.1} parent=11 // pred_check
        %p215 = pneg %p123
      $region26: #{mpqlb_pallas.1} parent=11 // pred_check_branch
        %217 = sbr.rel (%p215) target = $region28
      $region27: #{mpqlb_pallas.1} parent=11 // pred_region
        _
      $region28: #{mpqlb_pallas.1} parent=11 // pred_fallthru
        _
      // Predicated region
      $region29: #{mpqlb_pallas.1} parent=11 // pred_check
        %p218 = pneg %p144
      $region30: #{mpqlb_pallas.1} parent=11 // pred_check_branch
        %220 = sbr.rel (%p218) target = $region32
      $region31: #{mpqlb_pallas.1} parent=11 // pred_region
        _
      $region32: #{mpqlb_pallas.1} parent=11 // pred_fallthru
        _
      // Predicated region
      $region33: #{mpqlb_pallas.1} parent=11 // pred_check
        %p221 = pneg %p165
      $region34: #{mpqlb_pallas.1} parent=11 // pred_check_branch
        %223 = sbr.rel (%p221) target = $region36
      $region35: #{mpqlb_pallas.1} parent=11 // pred_region
        _
      $region36: #{mpqlb_pallas.1} parent=11 // pred_fallthru
        _
    $region12: #{mpqlb_pallas.1} parent=5 // pred_fallthru
      _
    %p224 = scmp.lt.s32.totalorder %s13, 2
    // Predicated region
    $region37: #{mpqlb_pallas.1} parent=5 // pred_check
      %p225 = pneg %p224
    $region38: #{mpqlb_pallas.1} parent=5 // pred_check_branch
      %227 = sbr.rel (%p225) target = $region40
    $region39: #{mpqlb_pallas.1} parent=5 // pred_region
      // Predicated region
      $region41: #{mpqlb_pallas.1} parent=39 // pred_check
        %p228 = pneg %p33
      $region42: #{mpqlb_pallas.1} parent=39 // pred_check_branch
        %230 = sbr.rel (%p228) target = $region44
      $region43: #{mpqlb_pallas.1} parent=39 // pred_region
        %p231 = scmp.lt.s32.totalorder %s13, 1
        %s232 = scalar_select %p231, %s13, 1
        %s233 = smul.addr %s232, 8
        %s234 = smul.addr %s233, 8
        %s235 = scalar_lea.vmem %s0, %s234
      $region44: #{mpqlb_pallas.1} parent=39 // pred_fallthru
        _
    $region40: #{mpqlb_pallas.1} parent=5 // pred_fallthru
      _
    %p236 = scmp.le.s32.totalorder 1, %s13
    %p237 = scmp.lt.s32.totalorder %s13, 3
    %p238 = pnand %p236, %p237
    %p239 = pneg %p238
    // Predicated region
    $region45: #{mpqlb_pallas.1} parent=5 // pred_check
      _
    $region46: #{mpqlb_pallas.1} parent=5 // pred_check_branch
      %241 = sbr.rel (%p238) target = $region48
    $region47: #{mpqlb_pallas.1} parent=5 // pred_region
      %s242 = ssub.s32 %s13, 1
      %p243 = scmp.lt.s32.totalorder %s18, 1
      %s244 = scalar_select %p243, %s18, 1
      %s245 = smul.addr %s244, 8
      %s246 = smul.addr %s245, 8
      %s247 = scalar_lea.vmem %s0, %s246
      %p248 = pneg %p39
      %p249 = pneg %p36
      %p250 = pneg %p60
      %p251 = pneg %p57
      %p252 = pneg %p81
      %p253 = pneg %p78
      %p254 = pneg %p102
      %p255 = pneg %p99
      %p256 = pneg %p123
      %p257 = pneg %p120
      %p258 = pneg %p144
      %p259 = pneg %p141
      %p260 = pneg %p165
      %p261 = pneg %p162
      %p262 = pneg %p191
      %p263 = pneg %p188
      %p264 = scmp.lt.s32.totalorder %s18, 1
      %s265 = scalar_select %p264, %s18, 1
      %s266 = smul.addr %s265, 8
      %s267 = smul.addr %s266, 8
      %s268 = scalar_lea.vmem %s7, %s267
      %p269 = scmp.lt.s32.totalorder %s18, 1
      %s270 = scalar_select %p269, %s18, 1
      %s271 = smul.addr %s270, 8
      %s272 = smul.addr %s271, 8
      %s273 = scalar_lea.vmem %s0, %s272
      %p274 = scmp.lt.s32.totalorder %s18, 1
      %s275 = scalar_select %p274, %s18, 1
      %s276 = smul.addr %s275, 8
      %s277 = smul.addr %s276, 8
      %s278 = scalar_lea.vmem %s7, %s277
      %v279 = vld [vmem:[%s273] sm:$0xff]
      %v280 = vld [vmem:[%s273 + $0x8] sm:$0xff]
      %v281 = vld [vmem:[%s273 + $0x10] sm:$0xff]
      %v282 = vld [vmem:[%s273 + $0x18] sm:$0xff]
      %v283 = vld [vmem:[%s273 + $0x20] sm:$0xff]
      %v284 = vld [vmem:[%s273 + $0x28] sm:$0xff]
      %v285 = vld [vmem:[%s273 + $0x30] sm:$0xff]
      %v286 = vld [vmem:[%s273 + $0x38] sm:$0xff]
      %v287 = vadd.f32 %v279, %v281
      %v288 = vadd.f32 %v287, %v283
      %v289 = vadd.f32 %v288, %v285
      %v290 = vrot.slane %v289, 4
      %v291 = vadd.f32 %v289, %v290
      %v292 = vrot.slane %v291, 2
      %v293 = vadd.f32 %v291, %v292
      %v294 = vrot.slane %v293, 1
      %v295 = vadd.f32 %v293, %v294
      %v296 = vadd.f32 %v280, %v282
      %v297 = vadd.f32 %v296, %v284
      %v298 = vadd.f32 %v297, %v286
      %v299 = vrot.slane %v298, 4
      %v300 = vadd.f32 %v298, %v299
      %v301 = vrot.slane %v300, 2
      %v302 = vadd.f32 %v300, %v301
      %v303 = vrot.slane %v302, 1
      %v304 = vadd.f32 %v302, %v303
      %v305 = vrcp.pop 32.0
      %v306 = vmul.f32 %v295, %v305
      %v307 = vmul.f32 %v304, %v305
      %v308 = vsub.f32 %v279, %v306
      %v309 = vsub.f32 %v280, %v307
      %v310 = vsub.f32 %v281, %v306
      %v311 = vsub.f32 %v282, %v307
      %v312 = vsub.f32 %v283, %v306
      %v313 = vsub.f32 %v284, %v307
      %v314 = vsub.f32 %v285, %v306
      %v315 = vsub.f32 %v286, %v307
      %v316 = vmul.f32 %v308, %v308
      %v317 = vmul.f32 %v309, %v309
      %v318 = vmul.f32 %v310, %v310
      %v319 = vmul.f32 %v311, %v311
      %v320 = vmul.f32 %v312, %v312
      %v321 = vmul.f32 %v313, %v313
      %v322 = vmul.f32 %v314, %v314
      %v323 = vmul.f32 %v315, %v315
      %v324 = vadd.f32 %v316, %v318
      %v325 = vadd.f32 %v324, %v320
      %v326 = vadd.f32 %v325, %v322
      %v327 = vrot.slane %v326, 4
      %v328 = vadd.f32 %v326, %v327
      %v329 = vrot.slane %v328, 2
      %v330 = vadd.f32 %v328, %v329
      %v331 = vrot.slane %v330, 1
      %v332 = vadd.f32 %v330, %v331
      %v333 = vadd.f32 %v317, %v319
      %v334 = vadd.f32 %v333, %v321
      %v335 = vadd.f32 %v334, %v323
      %v336 = vrot.slane %v335, 4
      %v337 = vadd.f32 %v335, %v336
      %v338 = vrot.slane %v337, 2
      %v339 = vadd.f32 %v337, %v338
      %v340 = vrot.slane %v339, 1
      %v341 = vadd.f32 %v339, %v340
      %v342 = vmul.f32 %v332, %v305
      %v343 = vmul.f32 %v341, %v305
      %v344 = vadd.f32 %v342, 1e-06
      %v345 = vadd.f32 %v343, 1e-06
      %v346 = vrsqrt.pop %v344
      %v347 = vrsqrt.pop %v345
      %v348 = vmul.f32 %v308, %v346
      %v349 = vmul.f32 %v309, %v347
      %v350 = vmul.f32 %v310, %v346
      %v351 = vmul.f32 %v311, %v347
      %v352 = vmul.f32 %v312, %v346
      %v353 = vmul.f32 %v313, %v347
      %v354 = vmul.f32 %v314, %v346
      %v355 = vmul.f32 %v315, %v347
      %v356 = vld [vmem:[%s1] sm:$0xff]
      %v357 = vld [vmem:[%s1 + $0x8] sm:$0xff]
      %v358 = vld [vmem:[%s1 + $0x10] sm:$0xff]
      %v359 = vld [vmem:[%s1 + $0x18] sm:$0xff]
      %v360 = vld [vmem:[%s1 + $0x20] sm:$0xff]
      %v361 = vld [vmem:[%s1 + $0x28] sm:$0xff]
      %v362 = vld [vmem:[%s1 + $0x30] sm:$0xff]
      %v363 = vld [vmem:[%s1 + $0x38] sm:$0xff]
      %v364 = vmul.f32 %v348, %v356
      %v365 = vmul.f32 %v349, %v357
      %v366 = vmul.f32 %v350, %v358
      %v367 = vmul.f32 %v351, %v359
      %v368 = vmul.f32 %v352, %v360
      %v369 = vmul.f32 %v353, %v361
      %v370 = vmul.f32 %v354, %v362
      %v371 = vmul.f32 %v355, %v363
      %v372 = vld [vmem:[%s2] sm:$0xff]
      %v373 = vld [vmem:[%s2 + $0x8] sm:$0xff]
      %v374 = vld [vmem:[%s2 + $0x10] sm:$0xff]
      %v375 = vld [vmem:[%s2 + $0x18] sm:$0xff]
      %v376 = vld [vmem:[%s2 + $0x20] sm:$0xff]
      %v377 = vld [vmem:[%s2 + $0x28] sm:$0xff]
      %v378 = vld [vmem:[%s2 + $0x30] sm:$0xff]
      %v379 = vld [vmem:[%s2 + $0x38] sm:$0xff]
      %v380 = vadd.f32 %v364, %v372
      %v381 = vadd.f32 %v365, %v373
      %v382 = vadd.f32 %v366, %v374
      %v383 = vadd.f32 %v367, %v375
      %v384 = vadd.f32 %v368, %v376
      %v385 = vadd.f32 %v369, %v377
      %v386 = vadd.f32 %v370, %v378
      %v387 = vadd.f32 %v371, %v379
      %v388 = vld [vmem:[%s3] sm:$0xff]
      %vm389 = vcmask 261120
      %v391 = vsel %vm389, %v388, 0
      %393 = vmatprep.subr.mxu0 0.0
      %394 = vmatpush1.msra.mxu0 0.0
      %395 = vmatprep.subr.mxu0 0.0
      %396 = vmatpush1.msra.mxu0 0.0
      %397 = vmatprep.subr.mxu0 0.0
      %398 = vmatpush1.msra.mxu0 0.0
      %399 = vmatprep.subr.mxu0 0.0
      %400 = vmatpush1.msra.mxu0 0.0
      %401 = vmatprep.subr.mxu0 0.0
      %402 = vmatpush1.msra.mxu0 0.0
      %403 = vmatprep.subr.mxu0 0.0
      %404 = vmatpush1.msra.mxu0 0.0
      %405 = vmatprep.subr.mxu0 0.0
      %406 = vmatpush1.msra.mxu0 0.0
      %407 = vmatprep.subr.mxu0 0.0
      %408 = vmatpush1.msra.mxu0 0.0
      %409 = vmatprep.subr.mxu0 0.0
      %410 = vmatpush1.msra.mxu0 0.0
      %411 = vmatprep.subr.mxu0 0.0
      %412 = vmatpush1.msra.mxu0 0.0
      %413 = vmatprep.subr.mxu0 0.0
      %414 = vmatpush1.msra.mxu0 0.0
      %415 = vmatprep.subr.mxu0 0.0
      %416 = vmatpush1.msra.mxu0 0.0
      %417 = vmatprep.subr.mxu0 %v387
      %418 = vmatpush1.msra.mxu0 %v386
      %419 = vmatprep.subr.mxu0 %v385
      %420 = vmatpush1.msra.mxu0 %v384
      %421 = vmatprep.subr.mxu0 %v383
      %422 = vmatpush1.msra.mxu0 %v382
      %423 = vmatprep.subr.mxu0 %v381
      %424 = vmatpush1.msra.mxu0 %v380
      %425 = vmatprep.subr.mxu0 0.0
      %426 = vmatpush2.msra.mxu0 0.0
      %427 = vmatprep.subr.mxu0 0.0
      %428 = vmatpush2.msra.mxu0 0.0
      %429 = vmatprep.subr.mxu0 0.0
      %430 = vmatpush2.msra.mxu0 0.0
      %431 = vmatprep.subr.mxu0 0.0
      %432 = vmatpush2.msra.mxu0 0.0
      %433 = vmatprep.subr.mxu0 0.0
      %434 = vmatpush2.msra.mxu0 0.0
      %435 = vmatprep.subr.mxu0 0.0
      %436 = vmatpush2.msra.mxu0 0.0
      %437 = vmatprep.subr.mxu0 0.0
      %438 = vmatpush2.msra.mxu0 0.0
      %439 = vmatprep.subr.mxu0 0.0
      %440 = vmatpush2.msra.mxu0 0.0
      %441 = vmatprep.subr.mxu0 0.0
      %442 = vmatpush2.msra.mxu0 0.0
      %443 = vmatprep.subr.mxu0 0.0
      %444 = vmatpush2.msra.mxu0 0.0
      %445 = vmatprep.subr.mxu0 0.0
      %446 = vmatpush2.msra.mxu0 0.0
      %447 = vmatprep.subr.mxu0 0.0
      %448 = vmatpush2.msra.mxu0 0.0
      %449 = vmatprep.subr.mxu0 0.0
      %450 = vmatpush2.msra.mxu0 0.0
      %451 = vmatprep.subr.mxu0 0.0
      %452 = vmatpush2.msra.mxu0 0.0
      %453 = vmatprep.subr.mxu0 0.0
      %454 = vmatpush2.msra.mxu0 0.0
      %455 = vmatprep.subr.mxu0 0.0
      %456 = vmatpush2.msra.mxu0 0.0
      %457 = vmatprep.mubr.f32.mxu0 0.0
      %458 = vmatmul.mubr.f32.gmra.mxu0 %v391
      %v459 = vpop.f32.mrf.mxu0
      %v460 = vadd.f32 0.0, %v459
      %v461 = vpop.f32.mrf.mxu0
      %v462 = vadd.f32 0.0, %v461
      %463 = vdwg.mxu0
      %v464 = vadd.f32 %v380, %v382
      %v465 = vadd.f32 %v464, %v384
      %v466 = vadd.f32 %v465, %v460
      %v467 = vrot.slane %v466, 4
      %v468 = vadd.f32 %v466, %v467
      %v469 = vrot.slane %v468, 2
      %v470 = vadd.f32 %v468, %v469
      %v471 = vrot.slane %v470, 1
      %v472 = vadd.f32 %v470, %v471
      %v473 = vadd.f32 %v381, %v383
      %v474 = vadd.f32 %v473, %v385
      %v475 = vadd.f32 %v474, %v462
      %v476 = vrot.slane %v475, 4
      %v477 = vadd.f32 %v475, %v476
      %v478 = vrot.slane %v477, 2
      %v479 = vadd.f32 %v477, %v478
      %v480 = vrot.slane %v479, 1
      %v481 = vadd.f32 %v479, %v480
      %v482 = vmul.f32 %v472, %v305
      %v483 = vmul.f32 %v481, %v305
      %v484 = vsub.f32 %v380, %v482
      %v485 = vsub.f32 %v381, %v483
      %v486 = vsub.f32 %v382, %v482
      %v487 = vsub.f32 %v383, %v483
      %v488 = vsub.f32 %v384, %v482
      %v489 = vsub.f32 %v385, %v483
      %v490 = vsub.f32 %v460, %v482
      %v491 = vsub.f32 %v462, %v483
      %v492 = vmul.f32 %v484, %v484
      %v493 = vmul.f32 %v485, %v485
      %v494 = vmul.f32 %v486, %v486
      %v495 = vmul.f32 %v487, %v487
      %v496 = vmul.f32 %v488, %v488
      %v497 = vmul.f32 %v489, %v489
      %v498 = vmul.f32 %v490, %v490
      %v499 = vmul.f32 %v491, %v491
      %v500 = vadd.f32 %v492, %v494
      %v501 = vadd.f32 %v500, %v496
      %v502 = vadd.f32 %v501, %v498
      %v503 = vrot.slane %v502, 4
      %v504 = vadd.f32 %v502, %v503
      %v505 = vrot.slane %v504, 2
      %v506 = vadd.f32 %v504, %v505
      %v507 = vrot.slane %v506, 1
      %v508 = vadd.f32 %v506, %v507
      %v509 = vadd.f32 %v493, %v495
      %v510 = vadd.f32 %v509, %v497
      %v511 = vadd.f32 %v510, %v499
      %v512 = vrot.slane %v511, 4
      %v513 = vadd.f32 %v511, %v512
      %v514 = vrot.slane %v513, 2
      %v515 = vadd.f32 %v513, %v514
      %v516 = vrot.slane %v515, 1
      %v517 = vadd.f32 %v515, %v516
      %v518 = vmul.f32 %v508, %v305
      %v519 = vmul.f32 %v517, %v305
      %v520 = vadd.f32 %v518, 1e-06
      %v521 = vadd.f32 %v519, 1e-06
      %v522 = vrsqrt.pop %v520
      %v523 = vrsqrt.pop %v521
      %v524 = vmul.f32 %v484, %v522
      %v525 = vmul.f32 %v485, %v523
      %v526 = vmul.f32 %v486, %v522
      %v527 = vmul.f32 %v487, %v523
      %v528 = vmul.f32 %v488, %v522
      %v529 = vmul.f32 %v489, %v523
      %v530 = vmul.f32 %v490, %v522
      %v531 = vmul.f32 %v491, %v523
      %532 = vrot.lane.b32.xlu0 %v524, 17
      %v533 = vpop.permute.xlu0 %532
      %534 = vrot.lane.b32.xlu0 %v526, 17
      %v535 = vpop.permute.xlu0 %534
      %536 = vrot.lane.b32.xlu0 %v528, 17
      %v537 = vpop.permute.xlu0 %536
      %538 = vrot.lane.b32.xlu0 %v530, 17
      %v539 = vpop.permute.xlu0 %538
      %540 = vrot.lane.b32.xlu0 %v525, 17
      %v541 = vpop.permute.xlu0 %540
      %542 = vrot.lane.b32.xlu0 %v527, 17
      %v543 = vpop.permute.xlu0 %542
      %544 = vrot.lane.b32.xlu0 %v529, 17
      %v545 = vpop.permute.xlu0 %544
      %546 = vrot.lane.b32.xlu0 %v531, 17
      %v547 = vpop.permute.xlu0 %546
      %v548 = vlaneseq
      %v549 = vand.u32 %v548, 127
      %vm550 = vcmp.lt.s32.totalorder %v549, 17
      %v551 = vsel %vm550, %v533, %v541
      %v552 = vsel %vm550, %v535, %v543
      %v553 = vsel %vm550, %v537, %v545
      %v554 = vsel %vm550, %v539, %v547
      %v555 = vsel %vm550, %v541, %v533
      %v556 = vsel %vm550, %v543, %v535
      %v557 = vsel %vm550, %v545, %v537
      %v558 = vsel %vm550, %v547, %v539
      %v559 = vld [vmem:[%s4] sm:$0xff]
      %v560 = vld [vmem:[%s4 + $0x8] sm:$0xff]
      %v561 = vld [vmem:[%s4 + $0x10] sm:$0xff]
      %v562 = vld [vmem:[%s4 + $0x18] sm:$0xff]
      %v563 = vld [vmem:[%s4 + $0x20] sm:$0xff]
      %v564 = vld [vmem:[%s4 + $0x28] sm:$0xff]
      %v565 = vld [vmem:[%s4 + $0x30] sm:$0xff]
      %v566 = vld [vmem:[%s4 + $0x38] sm:$0xff]
      %v567 = vmul.f32 %v555, %v559
      %v568 = vmul.f32 %v551, %v560
      %v569 = vmul.f32 %v556, %v561
      %v570 = vmul.f32 %v552, %v562
      %v571 = vmul.f32 %v557, %v563
      %v572 = vmul.f32 %v553, %v564
      %v573 = vmul.f32 %v558, %v565
      %v574 = vmul.f32 %v554, %v566
      %575 = vrot.lane.b32.xlu0 %v524, 16
      %v576 = vpop.permute.xlu0 %575
      %577 = vrot.lane.b32.xlu0 %v526, 16
      %v578 = vpop.permute.xlu0 %577
      %579 = vrot.lane.b32.xlu0 %v528, 16
      %v580 = vpop.permute.xlu0 %579
      %581 = vrot.lane.b32.xlu0 %v530, 16
      %v582 = vpop.permute.xlu0 %581
      %583 = vrot.lane.b32.xlu0 %v525, 16
      %v584 = vpop.permute.xlu0 %583
      %585 = vrot.lane.b32.xlu0 %v527, 16
      %v586 = vpop.permute.xlu0 %585
      %587 = vrot.lane.b32.xlu0 %v529, 16
      %v588 = vpop.permute.xlu0 %587
      %589 = vrot.lane.b32.xlu0 %v531, 16
      %v590 = vpop.permute.xlu0 %589
      %vm591 = vcmp.lt.s32.totalorder %v549, 16
      %v592 = vsel %vm591, %v576, %v584
      %v593 = vsel %vm591, %v578, %v586
      %v594 = vsel %vm591, %v580, %v588
      %v595 = vsel %vm591, %v582, %v590
      %v596 = vsel %vm591, %v584, %v576
      %v597 = vsel %vm591, %v586, %v578
      %v598 = vsel %vm591, %v588, %v580
      %v599 = vsel %vm591, %v590, %v582
      %s600 = scalar_lea.vmem %s4, 64
      %v601 = vld [vmem:[%s600] sm:$0xff]
      %v602 = vld [vmem:[%s600 + $0x8] sm:$0xff]
      %v603 = vld [vmem:[%s600 + $0x10] sm:$0xff]
      %v604 = vld [vmem:[%s600 + $0x18] sm:$0xff]
      %v605 = vld [vmem:[%s600 + $0x20] sm:$0xff]
      %v606 = vld [vmem:[%s600 + $0x28] sm:$0xff]
      %v607 = vld [vmem:[%s600 + $0x30] sm:$0xff]
      %v608 = vld [vmem:[%s600 + $0x38] sm:$0xff]
      %v609 = vmul.f32 %v596, %v601
      %v610 = vmul.f32 %v592, %v602
      %v611 = vmul.f32 %v597, %v603
      %v612 = vmul.f32 %v593, %v604
      %v613 = vmul.f32 %v598, %v605
      %v614 = vmul.f32 %v594, %v606
      %v615 = vmul.f32 %v599, %v607
      %v616 = vmul.f32 %v595, %v608
      %v617 = vadd.f32 %v567, %v609
      %v618 = vadd.f32 %v568, %v610
      %v619 = vadd.f32 %v569, %v611
      %v620 = vadd.f32 %v570, %v612
      %v621 = vadd.f32 %v571, %v613
      %v622 = vadd.f32 %v572, %v614
      %v623 = vadd.f32 %v573, %v615
      %v624 = vadd.f32 %v574, %v616
      %625 = vrot.lane.b32.xlu0 %v524, 15
      %v626 = vpop.permute.xlu0 %625
      %627 = vrot.lane.b32.xlu0 %v526, 15
      %v628 = vpop.permute.xlu0 %627
      %629 = vrot.lane.b32.xlu0 %v528, 15
      %v630 = vpop.permute.xlu0 %629
      %631 = vrot.lane.b32.xlu0 %v530, 15
      %v632 = vpop.permute.xlu0 %631
      %633 = vrot.lane.b32.xlu0 %v525, 15
      %v634 = vpop.permute.xlu0 %633
      %635 = vrot.lane.b32.xlu0 %v527, 15
      %v636 = vpop.permute.xlu0 %635
      %637 = vrot.lane.b32.xlu0 %v529, 15
      %v638 = vpop.permute.xlu0 %637
      %639 = vrot.lane.b32.xlu0 %v531, 15
      %v640 = vpop.permute.xlu0 %639
      %vm641 = vcmp.lt.s32.totalorder %v549, 15
      %v642 = vsel %vm641, %v626, %v634
      %v643 = vsel %vm641, %v628, %v636
      %v644 = vsel %vm641, %v630, %v638
      %v645 = vsel %vm641, %v632, %v640
      %v646 = vsel %vm641, %v634, %v626
      %v647 = vsel %vm641, %v636, %v628
      %v648 = vsel %vm641, %v638, %v630
      %v649 = vsel %vm641, %v640, %v632
      %s650 = scalar_lea.vmem %s4, 128
      %v651 = vld [vmem:[%s650] sm:$0xff]
      %v652 = vld [vmem:[%s650 + $0x8] sm:$0xff]
      %v653 = vld [vmem:[%s650 + $0x10] sm:$0xff]
      %v654 = vld [vmem:[%s650 + $0x18] sm:$0xff]
      %v655 = vld [vmem:[%s650 + $0x20] sm:$0xff]
      %v656 = vld [vmem:[%s650 + $0x28] sm:$0xff]
      %v657 = vld [vmem:[%s650 + $0x30] sm:$0xff]
      %v658 = vld [vmem:[%s650 + $0x38] sm:$0xff]
      %v659 = vmul.f32 %v646, %v651
      %v660 = vmul.f32 %v642, %v652
      %v661 = vmul.f32 %v647, %v653
      %v662 = vmul.f32 %v643, %v654
      %v663 = vmul.f32 %v648, %v655
      %v664 = vmul.f32 %v644, %v656
      %v665 = vmul.f32 %v649, %v657
      %v666 = vmul.f32 %v645, %v658
      %v667 = vadd.f32 %v617, %v659
      %v668 = vadd.f32 %v618, %v660
      %v669 = vadd.f32 %v619, %v661
      %v670 = vadd.f32 %v620, %v662
      %v671 = vadd.f32 %v621, %v663
      %v672 = vadd.f32 %v622, %v664
      %v673 = vadd.f32 %v623, %v665
      %v674 = vadd.f32 %v624, %v666
      %675 = vrot.lane.b32.xlu0 %v524, 1
      %v676 = vpop.permute.xlu0 %675
      %677 = vrot.lane.b32.xlu0 %v526, 1
      %v678 = vpop.permute.xlu0 %677
      %679 = vrot.lane.b32.xlu0 %v528, 1
      %v680 = vpop.permute.xlu0 %679
      %681 = vrot.lane.b32.xlu0 %v530, 1
      %v682 = vpop.permute.xlu0 %681
      %683 = vrot.lane.b32.xlu0 %v525, 1
      %v684 = vpop.permute.xlu0 %683
      %685 = vrot.lane.b32.xlu0 %v527, 1
      %v686 = vpop.permute.xlu0 %685
      %687 = vrot.lane.b32.xlu0 %v529, 1
      %v688 = vpop.permute.xlu0 %687
      %689 = vrot.lane.b32.xlu0 %v531, 1
      %v690 = vpop.permute.xlu0 %689
      %vm691 = vcmp.lt.s32.totalorder %v549, 1
      %v692 = vsel %vm691, %v676, %v684
      %v693 = vsel %vm691, %v678, %v686
      %v694 = vsel %vm691, %v680, %v688
      %v695 = vsel %vm691, %v682, %v690
      %v696 = vsel %vm691, %v684, %v676
      %v697 = vsel %vm691, %v686, %v678
      %v698 = vsel %vm691, %v688, %v680
      %v699 = vsel %vm691, %v690, %v682
      %s700 = scalar_lea.vmem %s4, 192
      %v701 = vld [vmem:[%s700] sm:$0xff]
      %v702 = vld [vmem:[%s700 + $0x8] sm:$0xff]
      %v703 = vld [vmem:[%s700 + $0x10] sm:$0xff]
      %v704 = vld [vmem:[%s700 + $0x18] sm:$0xff]
      %v705 = vld [vmem:[%s700 + $0x20] sm:$0xff]
      %v706 = vld [vmem:[%s700 + $0x28] sm:$0xff]
      %v707 = vld [vmem:[%s700 + $0x30] sm:$0xff]
      %v708 = vld [vmem:[%s700 + $0x38] sm:$0xff]
      %v709 = vmul.f32 %v696, %v701
      %v710 = vmul.f32 %v692, %v702
      %v711 = vmul.f32 %v697, %v703
      %v712 = vmul.f32 %v693, %v704
      %v713 = vmul.f32 %v698, %v705
      %v714 = vmul.f32 %v694, %v706
      %v715 = vmul.f32 %v699, %v707
      %v716 = vmul.f32 %v695, %v708
      %v717 = vadd.f32 %v667, %v709
      %v718 = vadd.f32 %v668, %v710
      %v719 = vadd.f32 %v669, %v711
      %v720 = vadd.f32 %v670, %v712
      %v721 = vadd.f32 %v671, %v713
      %v722 = vadd.f32 %v672, %v714
      %v723 = vadd.f32 %v673, %v715
      %v724 = vadd.f32 %v674, %v716
      %s725 = scalar_lea.vmem %s4, 256
      %v726 = vld [vmem:[%s725] sm:$0xff]
      %v727 = vld [vmem:[%s725 + $0x8] sm:$0xff]
      %v728 = vld [vmem:[%s725 + $0x10] sm:$0xff]
      %v729 = vld [vmem:[%s725 + $0x18] sm:$0xff]
      %v730 = vld [vmem:[%s725 + $0x20] sm:$0xff]
      %v731 = vld [vmem:[%s725 + $0x28] sm:$0xff]
      %v732 = vld [vmem:[%s725 + $0x30] sm:$0xff]
      %v733 = vld [vmem:[%s725 + $0x38] sm:$0xff]
      %v734 = vmul.f32 %v524, %v726
      %v735 = vmul.f32 %v525, %v727
      %v736 = vmul.f32 %v526, %v728
      %v737 = vmul.f32 %v527, %v729
      %v738 = vmul.f32 %v528, %v730
      %v739 = vmul.f32 %v529, %v731
      %v740 = vmul.f32 %v530, %v732
      %v741 = vmul.f32 %v531, %v733
      %v742 = vadd.f32 %v717, %v734
      %v743 = vadd.f32 %v718, %v735
      %v744 = vadd.f32 %v719, %v736
      %v745 = vadd.f32 %v720, %v737
      %v746 = vadd.f32 %v721, %v738
      %v747 = vadd.f32 %v722, %v739
      %v748 = vadd.f32 %v723, %v740
      %v749 = vadd.f32 %v724, %v741
      %750 = vrot.lane.b32.xlu0 %v524, 127
      %v751 = vpop.permute.xlu0 %750
      %752 = vrot.lane.b32.xlu0 %v526, 127
      %v753 = vpop.permute.xlu0 %752
      %754 = vrot.lane.b32.xlu0 %v528, 127
      %v755 = vpop.permute.xlu0 %754
      %756 = vrot.lane.b32.xlu0 %v530, 127
      %v757 = vpop.permute.xlu0 %756
      %758 = vrot.lane.b32.xlu0 %v525, 127
      %v759 = vpop.permute.xlu0 %758
      %760 = vrot.lane.b32.xlu0 %v527, 127
      %v761 = vpop.permute.xlu0 %760
      %762 = vrot.lane.b32.xlu0 %v529, 127
      %v763 = vpop.permute.xlu0 %762
      %764 = vrot.lane.b32.xlu0 %v531, 127
      %v765 = vpop.permute.xlu0 %764
      %vm766 = vcmp.lt.s32.totalorder %v549, 127
      %v767 = vsel %vm766, %v751, %v759
      %v768 = vsel %vm766, %v753, %v761
      %v769 = vsel %vm766, %v755, %v763
      %v770 = vsel %vm766, %v757, %v765
      %v771 = vsel %vm766, %v759, %v751
      %v772 = vsel %vm766, %v761, %v753
      %v773 = vsel %vm766, %v763, %v755
      %v774 = vsel %vm766, %v765, %v757
      %s775 = scalar_lea.vmem %s4, 320
      %v776 = vld [vmem:[%s775] sm:$0xff]
      %v777 = vld [vmem:[%s775 + $0x8] sm:$0xff]
      %v778 = vld [vmem:[%s775 + $0x10] sm:$0xff]
      %v779 = vld [vmem:[%s775 + $0x18] sm:$0xff]
      %v780 = vld [vmem:[%s775 + $0x20] sm:$0xff]
      %v781 = vld [vmem:[%s775 + $0x28] sm:$0xff]
      %v782 = vld [vmem:[%s775 + $0x30] sm:$0xff]
      %v783 = vld [vmem:[%s775 + $0x38] sm:$0xff]
      %v784 = vmul.f32 %v767, %v776
      %v785 = vmul.f32 %v771, %v777
      %v786 = vmul.f32 %v768, %v778
      %v787 = vmul.f32 %v772, %v779
      %v788 = vmul.f32 %v769, %v780
      %v789 = vmul.f32 %v773, %v781
      %v790 = vmul.f32 %v770, %v782
      %v791 = vmul.f32 %v774, %v783
      %v792 = vadd.f32 %v742, %v784
      %v793 = vadd.f32 %v743, %v785
      %v794 = vadd.f32 %v744, %v786
      %v795 = vadd.f32 %v745, %v787
      %v796 = vadd.f32 %v746, %v788
      %v797 = vadd.f32 %v747, %v789
      %v798 = vadd.f32 %v748, %v790
      %v799 = vadd.f32 %v749, %v791
      %800 = vrot.lane.b32.xlu0 %v524, 113
      %v801 = vpop.permute.xlu0 %800
      %802 = vrot.lane.b32.xlu0 %v526, 113
      %v803 = vpop.permute.xlu0 %802
      %804 = vrot.lane.b32.xlu0 %v528, 113
      %v805 = vpop.permute.xlu0 %804
      %806 = vrot.lane.b32.xlu0 %v530, 113
      %v807 = vpop.permute.xlu0 %806
      %808 = vrot.lane.b32.xlu0 %v525, 113
      %v809 = vpop.permute.xlu0 %808
      %810 = vrot.lane.b32.xlu0 %v527, 113
      %v811 = vpop.permute.xlu0 %810
      %812 = vrot.lane.b32.xlu0 %v529, 113
      %v813 = vpop.permute.xlu0 %812
      %814 = vrot.lane.b32.xlu0 %v531, 113
      %v815 = vpop.permute.xlu0 %814
      %vm816 = vcmp.lt.s32.totalorder %v549, 113
      %v817 = vsel %vm816, %v801, %v809
      %v818 = vsel %vm816, %v803, %v811
      %v819 = vsel %vm816, %v805, %v813
      %v820 = vsel %vm816, %v807, %v815
      %v821 = vsel %vm816, %v809, %v801
      %v822 = vsel %vm816, %v811, %v803
      %v823 = vsel %vm816, %v813, %v805
      %v824 = vsel %vm816, %v815, %v807
      %s825 = scalar_lea.vmem %s4, 384
      %v826 = vld [vmem:[%s825] sm:$0xff]
      %v827 = vld [vmem:[%s825 + $0x8] sm:$0xff]
      %v828 = vld [vmem:[%s825 + $0x10] sm:$0xff]
      %v829 = vld [vmem:[%s825 + $0x18] sm:$0xff]
      %v830 = vld [vmem:[%s825 + $0x20] sm:$0xff]
      %v831 = vld [vmem:[%s825 + $0x28] sm:$0xff]
      %v832 = vld [vmem:[%s825 + $0x30] sm:$0xff]
      %v833 = vld [vmem:[%s825 + $0x38] sm:$0xff]
      %v834 = vmul.f32 %v817, %v826
      %v835 = vmul.f32 %v821, %v827
      %v836 = vmul.f32 %v818, %v828
      %v837 = vmul.f32 %v822, %v829
      %v838 = vmul.f32 %v819, %v830
      %v839 = vmul.f32 %v823, %v831
      %v840 = vmul.f32 %v820, %v832
      %v841 = vmul.f32 %v824, %v833
      %v842 = vadd.f32 %v792, %v834
      %v843 = vadd.f32 %v793, %v835
      %v844 = vadd.f32 %v794, %v836
      %v845 = vadd.f32 %v795, %v837
      %v846 = vadd.f32 %v796, %v838
      %v847 = vadd.f32 %v797, %v839
      %v848 = vadd.f32 %v798, %v840
      %v849 = vadd.f32 %v799, %v841
      %850 = vrot.lane.b32.xlu0 %v524, 112
      %v851 = vpop.permute.xlu0 %850
      %852 = vrot.lane.b32.xlu0 %v526, 112
      %v853 = vpop.permute.xlu0 %852
      %854 = vrot.lane.b32.xlu0 %v528, 112
      %v855 = vpop.permute.xlu0 %854
      %856 = vrot.lane.b32.xlu0 %v530, 112
      %v857 = vpop.permute.xlu0 %856
      %858 = vrot.lane.b32.xlu0 %v525, 112
      %v859 = vpop.permute.xlu0 %858
      %860 = vrot.lane.b32.xlu0 %v527, 112
      %v861 = vpop.permute.xlu0 %860
      %862 = vrot.lane.b32.xlu0 %v529, 112
      %v863 = vpop.permute.xlu0 %862
      %864 = vrot.lane.b32.xlu0 %v531, 112
      %v865 = vpop.permute.xlu0 %864
      %vm866 = vcmp.lt.s32.totalorder %v549, 112
      %v867 = vsel %vm866, %v851, %v859
      %v868 = vsel %vm866, %v853, %v861
      %v869 = vsel %vm866, %v855, %v863
      %v870 = vsel %vm866, %v857, %v865
      %v871 = vsel %vm866, %v859, %v851
      %v872 = vsel %vm866, %v861, %v853
      %v873 = vsel %vm866, %v863, %v855
      %v874 = vsel %vm866, %v865, %v857
      %s875 = scalar_lea.vmem %s4, 448
      %v876 = vld [vmem:[%s875] sm:$0xff]
      %v877 = vld [vmem:[%s875 + $0x8] sm:$0xff]
      %v878 = vld [vmem:[%s875 + $0x10] sm:$0xff]
      %v879 = vld [vmem:[%s875 + $0x18] sm:$0xff]
      %v880 = vld [vmem:[%s875 + $0x20] sm:$0xff]
      %v881 = vld [vmem:[%s875 + $0x28] sm:$0xff]
      %v882 = vld [vmem:[%s875 + $0x30] sm:$0xff]
      %v883 = vld [vmem:[%s875 + $0x38] sm:$0xff]
      %v884 = vmul.f32 %v867, %v876
      %v885 = vmul.f32 %v871, %v877
      %v886 = vmul.f32 %v868, %v878
      %v887 = vmul.f32 %v872, %v879
      %v888 = vmul.f32 %v869, %v880
      %v889 = vmul.f32 %v873, %v881
      %v890 = vmul.f32 %v870, %v882
      %v891 = vmul.f32 %v874, %v883
      %v892 = vadd.f32 %v842, %v884
      %v893 = vadd.f32 %v843, %v885
      %v894 = vadd.f32 %v844, %v886
      %v895 = vadd.f32 %v845, %v887
      %v896 = vadd.f32 %v846, %v888
      %v897 = vadd.f32 %v847, %v889
      %v898 = vadd.f32 %v848, %v890
      %v899 = vadd.f32 %v849, %v891
      %900 = vrot.lane.b32.xlu0 %v524, 111
      %v901 = vpop.permute.xlu0 %900
      %902 = vrot.lane.b32.xlu0 %v526, 111
      %v903 = vpop.permute.xlu0 %902
      %904 = vrot.lane.b32.xlu0 %v528, 111
      %v905 = vpop.permute.xlu0 %904
      %906 = vrot.lane.b32.xlu0 %v530, 111
      %v907 = vpop.permute.xlu0 %906
      %908 = vrot.lane.b32.xlu0 %v525, 111
      %v909 = vpop.permute.xlu0 %908
      %910 = vrot.lane.b32.xlu0 %v527, 111
      %v911 = vpop.permute.xlu0 %910
      %912 = vrot.lane.b32.xlu0 %v529, 111
      %v913 = vpop.permute.xlu0 %912
      %914 = vrot.lane.b32.xlu0 %v531, 111
      %v915 = vpop.permute.xlu0 %914
      %vm916 = vcmp.lt.s32.totalorder %v549, 111
      %v917 = vsel %vm916, %v901, %v909
      %v918 = vsel %vm916, %v903, %v911
      %v919 = vsel %vm916, %v905, %v913
      %v920 = vsel %vm916, %v907, %v915
      %v921 = vsel %vm916, %v909, %v901
      %v922 = vsel %vm916, %v911, %v903
      %v923 = vsel %vm916, %v913, %v905
      %v924 = vsel %vm916, %v915, %v907
      %s925 = scalar_lea.vmem %s4, 512
      %v926 = vld [vmem:[%s925] sm:$0xff]
      %v927 = vld [vmem:[%s925 + $0x8] sm:$0xff]
      %v928 = vld [vmem:[%s925 + $0x10] sm:$0xff]
      %v929 = vld [vmem:[%s925 + $0x18] sm:$0xff]
      %v930 = vld [vmem:[%s925 + $0x20] sm:$0xff]
      %v931 = vld [vmem:[%s925 + $0x28] sm:$0xff]
      %v932 = vld [vmem:[%s925 + $0x30] sm:$0xff]
      %v933 = vld [vmem:[%s925 + $0x38] sm:$0xff]
      %v934 = vmul.f32 %v917, %v926
      %v935 = vmul.f32 %v921, %v927
      %v936 = vmul.f32 %v918, %v928
      %v937 = vmul.f32 %v922, %v929
      %v938 = vmul.f32 %v919, %v930
      %v939 = vmul.f32 %v923, %v931
      %v940 = vmul.f32 %v920, %v932
      %v941 = vmul.f32 %v924, %v933
      %v942 = vadd.f32 %v892, %v934
      %v943 = vadd.f32 %v893, %v935
      %v944 = vadd.f32 %v894, %v936
      %v945 = vadd.f32 %v895, %v937
      %v946 = vadd.f32 %v896, %v938
      %v947 = vadd.f32 %v897, %v939
      %v948 = vadd.f32 %v898, %v940
      %v949 = vadd.f32 %v899, %v941
      %v950 = vld [vmem:[%s5] sm:$0xff]
      %v951 = vld [vmem:[%s5 + $0x8] sm:$0xff]
      %v952 = vld [vmem:[%s5 + $0x10] sm:$0xff]
      %v953 = vld [vmem:[%s5 + $0x18] sm:$0xff]
      %v954 = vld [vmem:[%s5 + $0x20] sm:$0xff]
      %v955 = vld [vmem:[%s5 + $0x28] sm:$0xff]
      %v956 = vld [vmem:[%s5 + $0x30] sm:$0xff]
      %v957 = vld [vmem:[%s5 + $0x38] sm:$0xff]
      %v958 = vadd.f32 %v942, %v950
      %v959 = vadd.f32 %v943, %v951
      %v960 = vadd.f32 %v944, %v952
      %v961 = vadd.f32 %v945, %v953
      %v962 = vadd.f32 %v946, %v954
      %v963 = vadd.f32 %v947, %v955
      %v964 = vadd.f32 %v948, %v956
      %v965 = vadd.f32 %v949, %v957
      %v966 = vmax.f32 %v958, 0.0
      %v967 = vmax.f32 %v959, 0.0
      %v968 = vmax.f32 %v960, 0.0
      %v969 = vmax.f32 %v961, 0.0
      %v970 = vmax.f32 %v962, 0.0
      %v971 = vmax.f32 %v963, 0.0
      %v972 = vmax.f32 %v964, 0.0
      %v973 = vmax.f32 %v965, 0.0
      %v974 = vld [vmem:[%s6] sm:$0xff]
      %v975 = vld [vmem:[%s6 + $0x8] sm:$0xff]
      %v976 = vld [vmem:[%s6 + $0x10] sm:$0xff]
      %v977 = vld [vmem:[%s6 + $0x18] sm:$0xff]
      %v979 = vsel %vm389, %v974, 0
      %v982 = vsel %vm389, %v975, 0
      %v985 = vsel %vm389, %v976, 0
      %v988 = vsel %vm389, %v977, 0
      %990 = vmatprep.subr.mxu0 0.0
      %991 = vmatpush1.msra.mxu0 0.0
      %992 = vmatprep.subr.mxu0 0.0
      %993 = vmatpush1.msra.mxu0 0.0
      %994 = vmatprep.subr.mxu0 0.0
      %995 = vmatpush1.msra.mxu0 0.0
      %996 = vmatprep.subr.mxu0 0.0
      %997 = vmatpush1.msra.mxu0 0.0
      %998 = vmatprep.subr.mxu0 0.0
      %999 = vmatpush1.msra.mxu0 0.0
      %1000 = vmatprep.subr.mxu0 0.0
      %1001 = vmatpush1.msra.mxu0 0.0
      %1002 = vmatprep.subr.mxu0 0.0
      %1003 = vmatpush1.msra.mxu0 0.0
      %1004 = vmatprep.subr.mxu0 0.0
      %1005 = vmatpush1.msra.mxu0 0.0
      %1006 = vmatprep.subr.mxu0 0.0
      %1007 = vmatpush1.msra.mxu0 0.0
      %1008 = vmatprep.subr.mxu0 0.0
      %1009 = vmatpush1.msra.mxu0 0.0
      %1010 = vmatprep.subr.mxu0 0.0
      %1011 = vmatpush1.msra.mxu0 0.0
      %1012 = vmatprep.subr.mxu0 0.0
      %1013 = vmatpush1.msra.mxu0 0.0
      %1014 = vmatprep.subr.mxu0 %v973
      %1015 = vmatpush1.msra.mxu0 %v972
      %1016 = vmatprep.subr.mxu0 %v971
      %1017 = vmatpush1.msra.mxu0 %v970
      %1018 = vmatprep.subr.mxu0 %v969
      %1019 = vmatpush1.msra.mxu0 %v968
      %1020 = vmatprep.subr.mxu0 %v967
      %1021 = vmatpush1.msra.mxu0 %v966
      %1022 = vmatprep.subr.mxu0 0.0
      %1023 = vmatpush2.msra.mxu0 0.0
      %1024 = vmatprep.subr.mxu0 0.0
      %1025 = vmatpush2.msra.mxu0 0.0
      %1026 = vmatprep.subr.mxu0 0.0
      %1027 = vmatpush2.msra.mxu0 0.0
      %1028 = vmatprep.subr.mxu0 0.0
      %1029 = vmatpush2.msra.mxu0 0.0
      %1030 = vmatprep.subr.mxu0 0.0
      %1031 = vmatpush2.msra.mxu0 0.0
      %1032 = vmatprep.subr.mxu0 0.0
      %1033 = vmatpush2.msra.mxu0 0.0
      %1034 = vmatprep.subr.mxu0 0.0
      %1035 = vmatpush2.msra.mxu0 0.0
      %1036 = vmatprep.subr.mxu0 0.0
      %1037 = vmatpush2.msra.mxu0 0.0
      %1038 = vmatprep.subr.mxu0 0.0
      %1039 = vmatpush2.msra.mxu0 0.0
      %1040 = vmatprep.subr.mxu0 0.0
      %1041 = vmatpush2.msra.mxu0 0.0
      %1042 = vmatprep.subr.mxu0 0.0
      %1043 = vmatpush2.msra.mxu0 0.0
      %1044 = vmatprep.subr.mxu0 0.0
      %1045 = vmatpush2.msra.mxu0 0.0
      %1046 = vmatprep.subr.mxu0 0.0
      %1047 = vmatpush2.msra.mxu0 0.0
      %1048 = vmatprep.subr.mxu0 0.0
      %1049 = vmatpush2.msra.mxu0 0.0
      %1050 = vmatprep.subr.mxu0 0.0
      %1051 = vmatpush2.msra.mxu0 0.0
      %1052 = vmatprep.subr.mxu0 0.0
      %1053 = vmatpush2.msra.mxu0 0.0
      %1054 = vmatprep.mubr.f32.mxu0 0.0
      %1055 = vmatmul.mubr.f32.gmra.mxu0 %v979
      %v1056 = vpop.f32.mrf.mxu0
      %v1057 = vadd.f32 %v279, %v1056
      %v1058 = vpop.f32.mrf.mxu0
      %v1059 = vadd.f32 %v280, %v1058
      %1060 = vmatprep.mubr.f32.mxu0 0.0
      %1061 = vmatmul.mubr.f32.gmra.mxu0 %v982
      %v1062 = vpop.f32.mrf.mxu0
      %v1063 = vadd.f32 %v281, %v1062
      %v1064 = vpop.f32.mrf.mxu0
      %v1065 = vadd.f32 %v282, %v1064
      %1066 = vmatprep.mubr.f32.mxu0 0.0
      %1067 = vmatmul.mubr.f32.gmra.mxu0 %v985
      %v1068 = vpop.f32.mrf.mxu0
      %v1069 = vadd.f32 %v283, %v1068
      %v1070 = vpop.f32.mrf.mxu0
      %v1071 = vadd.f32 %v284, %v1070
      %1072 = vmatprep.mubr.f32.mxu0 0.0
      %1073 = vmatmul.mubr.f32.gmra.mxu0 %v988
      %v1074 = vpop.f32.mrf.mxu0
      %v1075 = vadd.f32 %v285, %v1074
      %v1076 = vpop.f32.mrf.mxu0
      %v1077 = vadd.f32 %v286, %v1076
      %1078 = vdwg.mxu0
      %1079 = vst [vmem:[%s278] sm:$0xff] %v1057
      %1080 = vst [vmem:[%s278 + $0x8] sm:$0xff] %v1059
      %1081 = vst [vmem:[%s278 + $0x10] sm:$0xff] %v1063
      %1082 = vst [vmem:[%s278 + $0x18] sm:$0xff] %v1065
      %1083 = vst [vmem:[%s278 + $0x20] sm:$0xff] %v1069
      %1084 = vst [vmem:[%s278 + $0x28] sm:$0xff] %v1071
      %1085 = vst [vmem:[%s278 + $0x30] sm:$0xff] %v1075
      %1086 = vst [vmem:[%s278 + $0x38] sm:$0xff] %v1077
      %p1087 = scmp.lt.s32.totalorder %s18, 1
      %s1088 = scalar_select %p1087, %s18, 1
      %s1089 = smul.addr %s1088, 8
      %s1090 = smul.addr %s1089, 8
      %s1091 = scalar_lea.vmem %s7, %s1090
      // Predicated region
      $region49: #{mpqlb_pallas.1} parent=47 // pred_check
        %p1092 = pneg %p188
      $region50: #{mpqlb_pallas.1} parent=47 // pred_check_branch
        %1094 = sbr.rel (%p1092) target = $region52
      $region51: #{mpqlb_pallas.1} parent=47 // pred_region
        _
      $region52: #{mpqlb_pallas.1} parent=47 // pred_fallthru
        _
    $region48: #{mpqlb_pallas.1} parent=5 // pred_fallthru
      _
    %p1095 = scmp.le.s32.totalorder 2, %s13
    // Predicated region
    $region53: #{mpqlb_pallas.1} parent=5 // pred_check
      %p1096 = pneg %p1095
    $region54: #{mpqlb_pallas.1} parent=5 // pred_check_branch
      %1098 = sbr.rel (%p1096) target = $region56
    $region55: #{mpqlb_pallas.1} parent=5 // pred_region
      %s1099 = ssub.s32 %s13, 2
      // Predicated region
      $region57: #{mpqlb_pallas.1} parent=55 // pred_check
        %p1100 = pneg %p194
      $region58: #{mpqlb_pallas.1} parent=55 // pred_check_branch
        %1102 = sbr.rel (%p1100) target = $region60
      $region59: #{mpqlb_pallas.1} parent=55 // pred_region
        %p1103 = scmp.lt.s32.totalorder %s19, 1
        %s1104 = scalar_select %p1103, %s19, 1
        %s1105 = smul.addr %s1104, 8
        %s1106 = smul.addr %s1105, 8
        %s1107 = scalar_lea.vmem %s7, %s1106
      $region60: #{mpqlb_pallas.1} parent=55 // pred_fallthru
        _
    $region56: #{mpqlb_pallas.1} parent=5 // pred_fallthru
      _
  $region6: #{mpqlb_pallas.1} parent=0 // loop_footer
    %s17 = sadd.s32 1, %s13
  $region7: #{mpqlb_pallas.1} parent=0 // loop_footer_branch
    %12 = sbr.rel target = $region3
  $region8: #{mpqlb_pallas.1} parent=0 // loop_exit
    _

</llo_original>
